<compile_context>
chip_gen: v7x
topology: tpu7x:2x2x1
jax: 0.10.0
libtpu: 0.0.40
codegen_flags: <defaults>
</compile_context>

<pallas_src>
import functools

import jax
import jax.numpy as jnp
from jax import lax
from jax.experimental import pallas as pl
from jax.experimental.pallas import tpu as pltpu

_LANE = 128
_TARGET_BLOCK_BYTES = 4 * 1024 * 1024   # per input buffer (x2 for double buffering)
_ACC_ROWS_MAX = 64                      # accumulator rows -> 8 independent f32 chains
_CHUNK_ROWS_MAX = 512                   # rows processed per unrolled inner chunk


def _round_up(a: int, b: int) -> int:
    return -(-a // b) * b


def _num_tensorcores() -> int:
    """Best-effort TensorCore count; falls back to 1 (safe on v5e/v6e)."""
    try:
        info = pltpu.get_tpu_info()
    except Exception:
        return 1
    for attr in ("num_cores", "core_count", "num_tensorcores",
                 "tensorcore_count", "cores_per_chip", "num_cores_per_chip"):
        v = getattr(info, attr, None)
        if isinstance(v, int) and 1 <= v <= 8:
            return v
    return 1


def _sum_sq_kernel(x_ref, o_ref, *, block_rows, chunk_rows, acc_rows,
                   rows_total, num_inner, needs_mask):
    """Accumulate sum(x^2) of this split's row slab into its (acc_rows,128) block.

    grid = (num_splits, num_inner); inner axis is the reduction ("arbitrary").
    x_ref: (block_rows, 128) tile in the input's native dtype.
    o_ref: (acc_rows, 128) f32 output block, resident across the inner axis,
           used directly as the accumulator (final cross-lane reduce happens
           once, in the wrapper).
    """
    inner = pl.program_id(1)

    @pl.when(inner == 0)
    def _init():
        o_ref[...] = jnp.zeros_like(o_ref)

    num_chunks = block_rows // chunk_rows
    groups = chunk_rows // acc_rows

    def partial_sums(limit):
        # limit=None -> all rows of this block are valid (fast path, no mask).
        acc = jnp.zeros((acc_rows, _LANE), jnp.float32)
        for c in range(num_chunks):           # static unroll; static slices
            base = c * chunk_rows
            xt = x_ref[pl.ds(base, chunk_rows), :].astype(jnp.float32)
            if limit is not None:
                # Mask BEFORE squaring so garbage/NaN rows in over-read or
                # clamped-duplicate blocks cannot propagate.
                rid = base + lax.broadcasted_iota(
                    jnp.int32, (chunk_rows, _LANE), 0)
                xt = jnp.where(rid < limit, xt, 0.0)
            sq = xt * xt
            if groups > 1:
                sq = sq.reshape(groups, acc_rows, _LANE).sum(axis=0)
            acc = acc + sq
        return acc

    if not needs_mask:
        o_ref[...] += partial_sums(None)
    else:
        logical_block = pl.program_id(0) * num_inner + inner
        remaining = rows_total - logical_block * block_rows

        @pl.when(remaining >= block_rows)     # bulk steps: no mask ops at all
        def _full():
            o_ref[...] += partial_sums(None)

        @pl.when(remaining < block_rows)      # last / clamped-duplicate block only
        def _edge():
            o_ref[...] += partial_sums(remaining)


def hmr_loss(x: jax.Array) -> jax.Array:
    """Scalar loss = mean(x**2); sum-of-squares reduction in a Pallas kernel."""
    n_elems = int(x.size)
    if n_elems == 0:
        return jnp.float32(0.0)               # degenerate input guard

    flat = x.reshape(-1)                      # native dtype; no upcast, no pad
    rows = n_elems // _LANE
    tail = n_elems - rows * _LANE             # <128 trailing elements

    if rows == 0:
        # Tiny input (<128 elems): no lane-aligned bulk to stream.
        return jnp.sum(flat.astype(jnp.float32) ** 2) / n_elems

    # 128-aligned bulk for the kernel.  When tail == 0 (common case) this is
    # the whole array and no copy happens; the rare non-divisible case takes
    # one prefix slice instead of a full-tensor concatenate.
    bulk = rows * _LANE
    x2d = (flat if tail == 0 else flat[:bulk]).reshape(rows, _LANE)

    itemsize = x2d.dtype.itemsize
    sub = max(8, 32 // itemsize)              # sublane multiple: f32->8, bf16->16, int8->32

    # --- tile geometry: acc_rows | chunk_rows | block_rows -------------------
    acc_rows = min(_ACC_ROWS_MAX, _round_up(rows, sub))
    chunk_units = max(1, min(_CHUNK_ROWS_MAX // acc_rows, -(-rows // acc_rows)))
    chunk_rows = acc_rows * chunk_units
    raw_target = _TARGET_BLOCK_BYTES // (_LANE * itemsize)     # dtype-aware budget
    target_rows = max(chunk_rows, (raw_target // chunk_rows) * chunk_rows)
    block_rows = min(target_rows, _round_up(rows, chunk_rows))

    total_blocks = -(-rows // block_rows)
    num_splits = max(1, min(_num_tensorcores(), total_blocks))
    num_inner = -(-total_blocks // num_splits)
    # Mask needed iff the (splits x inner x block_rows) tiling over-covers the
    # true row count (partial last block and/or clamped duplicate blocks).
    needs_mask = (num_splits * num_inner * block_rows) != rows
    max_block = total_blocks - 1

    def x_index_map(c, i):
        # Clamp so no DMA targets a block fully past the array; redundant
        # clamped blocks are zeroed by the pl.when-gated in-kernel mask.
        return (jnp.minimum(c * num_inner + i, max_block), 0)

    kernel = functools.partial(
        _sum_sq_kernel,
        block_rows=block_rows,
        chunk_rows=chunk_rows,
        acc_rows=acc_rows,
        rows_total=rows,
        num_inner=num_inner,
        needs_mask=needs_mask,
    )

    # 4 MiB/buffer double-buffered (~8 MiB) + tiny output fits every
    # generation's default scoped-VMEM limit, so no vmem_limit_bytes override.
    parts = pl.pallas_call(
        kernel,
        out_shape=jax.ShapeDtypeStruct((num_splits * acc_rows, _LANE), jnp.float32),
        grid_spec=pltpu.PrefetchScalarGridSpec(
            num_scalar_prefetch=0,
            grid=(num_splits, num_inner),
            in_specs=[pl.BlockSpec((block_rows, _LANE), x_index_map)],
            out_specs=pl.BlockSpec((acc_rows, _LANE), lambda c, i: (c, 0)),
        ),
        compiler_params=pltpu.CompilerParams(
            dimension_semantics=("parallel", "arbitrary"),
        ),
        cost_estimate=pl.CostEstimate(
            flops=2 * n_elems,
            transcendentals=0,
            bytes_accessed=bulk * itemsize
            + num_splits * acc_rows * _LANE * 4,
        ),
    )(x2d)

    total = jnp.sum(parts)                    # one cheap cross-lane reduce
    if tail:
        total = total + jnp.sum(flat[bulk:].astype(jnp.float32) ** 2)
    return total / n_elems


if __name__ == "__main__":
    key = jax.random.PRNGKey(0)
    # Small NCHW prediction tensor, consistent with conv-style HMR features.
    x = jax.random.normal(key, (2, 4, 16, 16), dtype=jnp.float32)

    loss = hmr_loss(x)
    jax.block_until_ready(loss)

    # Cross-check against plain-JAX reference of the documented semantics.
    ref = jnp.mean(x.astype(jnp.float32) ** 2)
    assert jnp.allclose(loss, ref, rtol=1e-5, atol=1e-6), (loss, ref)

    print("KERNEL_OK")
</pallas_src>

<mosaic_0001>
module attributes {stable_mosaic.version = 11 : i64} {
  func.func @_sum_sq_kernel(%arg0: i32, %arg1: i32, %arg2: memref<16x128xf32, #tpu.memory_space<vmem>>, %arg3: memref<16x128xf32, #tpu.memory_space<vmem>>) attributes {dimension_semantics = [#tpu.dimension_semantics<parallel>, #tpu.dimension_semantics<arbitrary>], iteration_bounds = array<i64: 1, 1>, scalar_prefetch = 0 : i64, scratch_operands = 0 : i64, tpu.core_type = #tpu.core_type<tc>, window_params = [{transform_indices = @transform_0, window_bounds = array<i64: 16, 128>}, {transform_indices = @transform_1, window_bounds = array<i64: 16, 128>}]} {
    %c0_i32 = arith.constant 0 : i32
    %0 = arith.cmpi eq, %arg1, %c0_i32 : i32
    %1 = arith.extui %0 : i1 to i32
    %c0_i32_0 = arith.constant 0 : i32
    %2 = arith.cmpi ne, %1, %c0_i32_0 : i32
    scf.if %2 {
      %cst_6 = arith.constant 0.000000e+00 : f32
      %10 = vector.broadcast %cst_6 : f32 to vector<16x128xf32>
      %c0_7 = arith.constant 0 : index
      %c0_8 = arith.constant 0 : index
      %11 = vector.load %arg3[%c0_7, %c0_8] : memref<16x128xf32, #tpu.memory_space<vmem>>, vector<16x128xf32>
      tpu.vector_store %arg3[%c0_7, %c0_8], %10 {strides = array<i32>} : memref<16x128xf32, #tpu.memory_space<vmem>>, vector<16x128xf32>,
    } else {
    }
    %c0 = arith.constant 0 : index
    %c0_1 = arith.constant 0 : index
    %3 = vector.load %arg3[%c0, %c0_1] : memref<16x128xf32, #tpu.memory_space<vmem>>, vector<16x128xf32>
    %cst = arith.constant 0.000000e+00 : f32
    %4 = vector.broadcast %cst : f32 to vector<16x128xf32>
    %c0_2 = arith.constant 0 : index
    %c0_3 = arith.constant 0 : index
    %5 = vector.load %arg2[%c0_2, %c0_3] : memref<16x128xf32, #tpu.memory_space<vmem>>, vector<16x128xf32>
    %6 = arith.mulf %5, %5 : vector<16x128xf32>
    %7 = arith.addf %4, %6 : vector<16x128xf32>
    %8 = arith.addf %3, %7 : vector<16x128xf32>
    %c0_4 = arith.constant 0 : index
    %c0_5 = arith.constant 0 : index
    %9 = vector.load %arg3[%c0_4, %c0_5] : memref<16x128xf32, #tpu.memory_space<vmem>>, vector<16x128xf32>
    tpu.vector_store %arg3[%c0_4, %c0_5], %8 {strides = array<i32>} : memref<16x128xf32, #tpu.memory_space<vmem>>, vector<16x128xf32>,
    return
  }
  func.func @transform_0(%arg0: i32, %arg1: i32) -> (i32, i32) {
    %c1_i32 = arith.constant 1 : i32
    %0 = arith.muli %arg0, %c1_i32 : i32
    %1 = arith.addi %0, %arg1 : i32
    %c0_i32 = arith.constant 0 : i32
    %2 = arith.minsi %1, %c0_i32 : i32
    %c0_i32_0 = arith.constant 0 : i32
    %c0_i32_1 = arith.constant 0 : i32
    return %2, %c0_i32_0 : i32, i32
  }
  func.func @transform_1(%arg0: i32, %arg1: i32) -> (i32, i32) {
    %c0_i32 = arith.constant 0 : i32
    %c0_i32_0 = arith.constant 0 : i32
    return %arg0, %c0_i32 : i32, i32
  }
}

</mosaic_0001>

<llo_original>
// kernel: tpu_custom_call.1
$region0: #{tpu_custom_call.1}
  #allocation0 [shape = 'u32[]', space=smem, size = 0x4, offset = 0x4, fixed_abs, tag = 'smem constant byte address 0x4 - core index']
  #allocation1 [shape = 'u32[144,128]{1,0:T(1,128)}', space=vmem, size = 0x12000, scoped, tag = 'internal scratch']
  %s0 = inlined_call_operand.hbm [shape: f32[16,128], index: 0, kind: input, shape index: {}]
  %s1 = inlined_call_operand.hbm [shape: f32[16,128], index: 1, kind: output, shape index: {}]
  %s2 = sld [smem:[#allocation0]]
  $region22: #{tpu_custom_call.1} parent=0
    _
  %s4 = ssub.s32 1, %s2
  %s5 = scalar_select 0, %s4, %s2
  $region1: #{tpu_custom_call.1} parent=0
    #allocation2 [shape = 'u8[8192]{0}', space=vmem, size = 0x2000, scoped, tag = 'input window, operand 0, single buffered']
    #allocation3 [shape = 's32[1]{0}', space=sflag, size = 0x4, scoped, tag = 'scoped memory for tpu_custom_call.1']
    #allocation4 [shape = 's32[1]{0}', space=sflag, size = 0x4, scoped, tag = 'scoped memory for tpu_custom_call.1']
    #allocation5 [shape = 'u8[8192]{0}', space=vmem, size = 0x2000, scoped, tag = 'output window, operand 0, single buffered']
    %6 = vsyncpa [#allocation3], 0
    %7 = vsyncpa [#allocation4], 0
    // Predicated region
    $region2: #{tpu_custom_call.1} parent=1 // pred_check
      _
    $region3: #{tpu_custom_call.1} parent=1 // pred_check_branch
      %9 = sbr.rel (0) target = $region5
    $region4: #{tpu_custom_call.1} parent=1 // pred_region
      %s10 = sadd.s32 0, 0
      %p11 = scmp.lt.s32.totalorder %s10, 0
      %s12 = scalar_select %p11, %s10, 0
      %s13 = smul.u32 2, %s12
      %s15 = ssub.s32 256, 256
      %16 = vsyncadd [#allocation3], %s15
      %s17 = smul.addr %s13, 128
      %s18 = scalar_lea.hbm %s0, %s17
      %s19 = sshll.u32 [#allocation2], 4
      %s20 = int_to_ptr.vmem [resolvable:$true] %s19
      %25 = dma.hbm_to_vmem [thread:$0]  %s18, 256, %s20, [#allocation3], 128, 128, 8
    $region5: #{tpu_custom_call.1} parent=1 // pred_fallthru
      _
    // Predicated region
    $region6: #{tpu_custom_call.1} parent=1 // pred_check
      _
    $region7: #{tpu_custom_call.1} parent=1 // pred_check_branch
      %27 = sbr.rel (0) target = $region9
    $region8: #{tpu_custom_call.1} parent=1 // pred_region
      %28 = dma.done [#allocation3], 256
    $region9: #{tpu_custom_call.1} parent=1 // pred_fallthru
      _
    %s29 = sadd.s32 0, 0
    %p30 = scmp.lt.s32.totalorder %s29, 0
    %s31 = scalar_select %p30, %s29, 0
    %s32 = smul.u32 2, %s31
    %p33 = scmp.eq.s32.totalorder 0, 0
    // Predicated region
    $region10: #{tpu_custom_call.1} parent=1 // pred_check
      %p34 = pneg %p33
    $region11: #{tpu_custom_call.1} parent=1 // pred_check_branch
      %36 = sbr.rel (%p34) target = $region13
    $region12: #{tpu_custom_call.1} parent=1 // pred_region
      %37 = vst [vmem:[#allocation5] sm:$0xff] 0.0
      %38 = vst [vmem:[#allocation5 + $0x8] sm:$0xff] 0.0
    $region13: #{tpu_custom_call.1} parent=1 // pred_fallthru
      _
    %v39 = vld [vmem:[#allocation5] sm:$0xff]
    %v40 = vld [vmem:[#allocation5 + $0x8] sm:$0xff]
    %v41 = vld [vmem:[#allocation2] sm:$0xff]
    %v42 = vld [vmem:[#allocation2 + $0x8] sm:$0xff]
    %v43 = vmul.f32 %v41, %v41
    %v44 = vmul.f32 %v42, %v42
    %v45 = vadd.f32 %v43, 0.0
    %v46 = vadd.f32 %v44, 0.0
    %v47 = vadd.f32 %v39, %v45
    %v48 = vadd.f32 %v40, %v46
    %49 = vst [vmem:[#allocation5] sm:$0xff] %v47
    %50 = vst [vmem:[#allocation5 + $0x8] sm:$0xff] %v48
    // Predicated region
    $region14: #{tpu_custom_call.1} parent=1 // pred_check
      _
    $region15: #{tpu_custom_call.1} parent=1 // pred_check_branch
      %52 = sbr.rel (0) target = $region17
    $region16: #{tpu_custom_call.1} parent=1 // pred_region
      %s54 = ssub.s32 256, 256
      %55 = vsyncadd [#allocation4], %s54
      %s56 = sshll.u32 [#allocation5], 4
      %s57 = int_to_ptr.vmem [resolvable:$true] %s56
      %62 = dma.vmem_to_hbm [thread:$0]  %s57, 256, %s1, [#allocation4], 128, 128, 8
    $region17: #{tpu_custom_call.1} parent=1 // pred_fallthru
      _
    // Predicated region
    $region18: #{tpu_custom_call.1} parent=1 // pred_check
      _
    $region19: #{tpu_custom_call.1} parent=1 // pred_check_branch
      %64 = sbr.rel (0) target = $region21
    $region20: #{tpu_custom_call.1} parent=1 // pred_region
      %65 = dma.done [#allocation4], 256
    $region21: #{tpu_custom_call.1} parent=1 // pred_fallthru
      _
    %66 = vsyncpa [#allocation3], 1
    %67 = vsyncpa [#allocation4], 1

</llo_original>
